<compile_context>
chip_gen: v5e
topology: v5e:2x2
jax: 0.10.0
libtpu: 0.0.40
codegen_flags: <defaults>
</compile_context>

<pallas_src>
import functools

import jax
import jax.numpy as jnp
from jax.experimental import pallas as pl
from jax.experimental.pallas import tpu as pltpu

_MIB = 1024 * 1024
_LANE = 128


def _round_up(x, m):
    return ((x + m - 1) // m) * m


def _sublane(itemsize):
    # second-minor tiling granularity: 8 for f32, 16 for bf16, 32 for int8/fp8
    return 8 * max(1, 4 // itemsize)


def _vmem_budget_and_limit():
    """Generation-aware resident-footprint budget and scoped VMEM limit."""
    cap = 64 * _MIB  # v7x per-core physical VMEM is the floor across v5e/v6e/v7x
    try:
        cap = int(getattr(pltpu.get_tpu_info(), "vmem_capacity_bytes", cap))
    except Exception:
        pass
    budget = min(cap // 2, 64 * _MIB)     # ~32 MiB on v7x, ~64 MiB on v5e/v6e
    limit = max(32 * _MIB, min(budget + 16 * _MIB, cap - 16 * _MIB))
    return budget, limit


# ----------------------------------------------------------------------------
# Path A: row-banded weights (small-channel / small-width regime).
# The dw taps are folded into a (Wp*C_in, W*C_out) banded weight matrix per dh,
# so one row tile needs only 3 dense matmuls and both the input rows and the
# output rows are lane-dense with zero in-kernel relayouts.
# ----------------------------------------------------------------------------
def _band_weights(w_oihw, W):
    """(C_out, C_in, 3, 3) -> (3, Wp*C_in, W*C_out) dh-banded weights."""
    C_out, C_in = w_oihw.shape[0], w_oihw.shape[1]
    Wp = W + 2
    w_t = jnp.transpose(w_oihw, (2, 3, 1, 0))                 # (dh, dw, ci, co)
    dw = jnp.arange(Wp)[:, None] - jnp.arange(W)[None, :]      # (Wp, W)
    valid = (dw >= 0) & (dw <= 2)
    band = w_t[:, jnp.clip(dw, 0, 2)]                          # (3, Wp, W, ci, co)
    band = band * valid[None, :, :, None, None].astype(band.dtype)
    band = jnp.transpose(band, (0, 1, 3, 2, 4))                # (3, Wp, ci, W, co)
    return band.reshape(3, Wp * C_in, W * C_out)


def _pick_tile_h_band(H, W, C_in, C_out, itemsize, budget):
    sub = _sublane(itemsize)
    Hp, Wp = H + 2, W + 2
    k = _round_up(Wp * C_in, _LANE)
    n = _round_up(W * C_out, _LANE)
    in_block = Hp * k * itemsize                                # padded image (1 buf)
    wgt = 2 * 3 * _round_up(Wp * C_in, sub) * n * itemsize      # conservative 2x
    candidates = sorted(
        (t for t in range(1, H + 1) if H % t == 0 and (t == H or t % sub == 0)),
        reverse=True)
    chosen = candidates[-1]
    for t in candidates:
        out_block = _round_up(t, sub) * n * itemsize
        slab = _round_up(t + 2, sub) * k * itemsize             # in-kernel row slab
        acc = _round_up(t, 8) * n * 4                           # f32 accumulator
        if 2 * in_block + wgt + 2 * out_block + slab + acc <= budget:
            chosen = t
            break
    return chosen


def _conv3x3_band_kernel(x_ref, w_ref, o_ref, *, tile_h):
    # x_ref: (Hp, Wp*C_in)         padded rows, channels folded into lanes
    # w_ref: (3, Wp*C_in, W*C_out) dh-banded weights
    # o_ref: (tile_h, W*C_out)     conv output rows, lane-dense
    h0 = pl.multiple_of(pl.program_id(1) * tile_h, tile_h)
    rows = x_ref[pl.ds(h0, tile_h + 2), :]         # aligned slab, static dh shifts
    acc = jnp.dot(rows[0:tile_h], w_ref[0], preferred_element_type=jnp.float32)
    acc = acc + jnp.dot(rows[1:tile_h + 1], w_ref[1],
                        preferred_element_type=jnp.float32)
    acc = acc + jnp.dot(rows[2:tile_h + 2], w_ref[2],
                        preferred_element_type=jnp.float32)
    o_ref[...] = acc.astype(o_ref.dtype)


def _conv3x3_band(x_pad, w_oihw, budget, vmem_limit):
    B, Hp, Wp, C_in = x_pad.shape
    H, W = Hp - 2, Wp - 2
    C_out = w_oihw.shape[0]
    dt = x_pad.dtype
    itemsize = jnp.dtype(dt).itemsize
    sub = _sublane(itemsize)

    x_flat = x_pad.reshape(B, Hp, Wp * C_in)
    band = _band_weights(w_oihw, W).astype(dt)                  # (3, K, N)
    K, N = Wp * C_in, W * C_out

    tile_h = _pick_tile_h_band(H, W, C_in, C_out, itemsize, budget)

    # Constant weight block: single-buffer it only when large enough to matter.
    w_spec = pl.BlockSpec((3, K, N), lambda b, i: (0, 0, 0))
    wgt_bytes = 3 * _round_up(K, sub) * _round_up(N, _LANE) * itemsize
    if wgt_bytes > _MIB and hasattr(pl, "Buffered"):
        w_spec = pl.BlockSpec((3, K, N), lambda b, i: (0, 0, 0),
                              pipeline_mode=pl.Buffered(1))

    conv = pl.pallas_call(
        functools.partial(_conv3x3_band_kernel, tile_h=tile_h),
        out_shape=jax.ShapeDtypeStruct((B, H, N), dt),
        grid_spec=pltpu.PrefetchScalarGridSpec(
            num_scalar_prefetch=0,
            grid=(B, H // tile_h),
            in_specs=[
                # Full padded image, revisited across the row-tile axis
                # (one DMA per batch).
                pl.BlockSpec((None, Hp, K), lambda b, i: (b, 0, 0)),
                w_spec,
            ],
            out_specs=pl.BlockSpec((None, tile_h, N), lambda b, i: (b, i, 0)),
        ),
        compiler_params=pltpu.CompilerParams(
            # Row-tile axis "arbitrary" so megacore sharding happens on batch.
            dimension_semantics=("parallel", "arbitrary"),
            vmem_limit_bytes=vmem_limit,
        ),
    )(x_flat, band)
    return conv.reshape(B, H, W, C_out)


# ----------------------------------------------------------------------------
# Path B: general channels-minor matmul fallback (larger n_feat), kept close to
# the previously reviewed-correct structure.
# TODO(synk): fuse the 9 taps into one K=9*C_in im2col dot here as well.
# ----------------------------------------------------------------------------
def _pick_tile_h_chan(H, W, C_in, C_out, itemsize, budget):
    sub = _sublane(itemsize)
    Hp, Wp = H + 2, W + 2
    cin_l = _round_up(C_in, _LANE)
    cout_l = _round_up(C_out, _LANE)
    in_block = Hp * _round_up(Wp, sub) * cin_l * itemsize
    wgt = 2 * 9 * _round_up(C_in, sub) * cout_l * itemsize
    candidates = sorted(
        (t for t in range(1, H + 1)
         if H % t == 0 and (t == H or (t * W) % sub == 0)),
        reverse=True)
    chosen = candidates[-1]
    for t in candidates:
        out_block = _round_up(t * W, sub) * cout_l * itemsize
        acc = _round_up(t * W, 8) * cout_l * 4
        if 2 * in_block + wgt + 2 * out_block + acc <= budget:
            chosen = t
            break
    return chosen


def _conv3x3_chan_kernel(x_ref, w_ref, o_ref, *, tile_h, width, c_in, c_out):
    # x_ref: (Hp, Wp, C_in) padded image (channels minor), resident per batch
    # w_ref: (9, C_in, C_out) tap-major weights
    # o_ref: (tile_h * W, C_out) conv output rows
    h0 = pl.multiple_of(pl.program_id(1) * tile_h, tile_h)
    wk = w_ref[...]                          # hoist weight load out of tap loop
    acc = None
    for dh in range(3):
        for dw in range(3):
            xs = x_ref[pl.ds(h0 + dh, tile_h), pl.ds(dw, width), :]
            xs = xs.reshape(tile_h * width, c_in)
            # native-dtype MXU operands; f32 accumulation only.
            p = jnp.dot(xs, wk[dh * 3 + dw], preferred_element_type=jnp.float32)
            acc = p if acc is None else acc + p
    o_ref[...] = acc.astype(o_ref.dtype)


def _conv3x3_channels(x_pad, w_oihw, budget, vmem_limit):
    B, Hp, Wp, C_in = x_pad.shape
    H, W = Hp - 2, Wp - 2
    C_out = w_oihw.shape[0]
    dt = x_pad.dtype
    itemsize = jnp.dtype(dt).itemsize

    w_k = jnp.transpose(w_oihw, (2, 3, 1, 0)).reshape(9, C_in, C_out).astype(dt)
    tile_h = _pick_tile_h_chan(H, W, C_in, C_out, itemsize, budget)

    conv = pl.pallas_call(
        functools.partial(_conv3x3_chan_kernel, tile_h=tile_h, width=W,
                          c_in=C_in, c_out=C_out),
        out_shape=jax.ShapeDtypeStruct((B, H * W, C_out), dt),
        grid_spec=pltpu.PrefetchScalarGridSpec(
            num_scalar_prefetch=0,
            grid=(B, H // tile_h),
            in_specs=[
                pl.BlockSpec((None, Hp, Wp, C_in), lambda b, i: (b, 0, 0, 0)),
                pl.BlockSpec((9, C_in, C_out), lambda b, i: (0, 0, 0)),
            ],
            out_specs=pl.BlockSpec((None, tile_h * W, C_out),
                                   lambda b, i: (b, i, 0)),
        ),
        compiler_params=pltpu.CompilerParams(
            dimension_semantics=("parallel", "arbitrary"),
            vmem_limit_bytes=vmem_limit,
        ),
    )(x_pad, w_k)
    return conv.reshape(B, H, W, C_out)


# ----------------------------------------------------------------------------
# Public wrapper: conv3x3 (Pallas) + PixelShuffle(2) (XLA layout work).
# ----------------------------------------------------------------------------
def upsample(x_nchw, weight_oihw):
    """Forward pass of MEASNet Upsample.

    x_nchw:      (B, C_in, H, W)
    weight_oihw: (2*C_in, C_in, 3, 3), bias-free conv
    returns:     (B, C_in // 2, 2H, 2W)
    """
    B, C_in, H, W = x_nchw.shape
    C_out = weight_oihw.shape[0]
    assert weight_oihw.shape == (C_out, C_in, 3, 3)
    assert C_out % 4 == 0, "PixelShuffle(2) needs conv channels divisible by 4"

    dt = x_nchw.dtype
    itemsize = jnp.dtype(dt).itemsize
    budget, vmem_limit = _vmem_budget_and_limit()

    # NCHW -> NHWC + the semantically required 1-pixel conv halo.
    x_nhwc = jnp.transpose(x_nchw, (0, 2, 3, 1))
    x_pad = jnp.pad(x_nhwc, ((0, 0), (1, 1), (1, 1), (0, 0)))
    Hp, Wp = H + 2, W + 2

    # Dispatch: banded weights give lane-dense input/output with no in-kernel
    # relayouts but grow as ~6*W^2*C_in^2; use them in the small-channel /
    # small-width regime, otherwise the general channels-minor matmul path.
    sub = _sublane(itemsize)
    band_bytes = (3 * _round_up(Wp * C_in, sub)
                  * _round_up(W * C_out, _LANE) * itemsize)
    if band_bytes <= min(4 * _MIB, budget // 8):
        conv = _conv3x3_band(x_pad, weight_oihw, budget, vmem_limit)
    else:
        conv = _conv3x3_channels(x_pad, weight_oihw, budget, vmem_limit)

    # PixelShuffle(2) + back to NCHW (pure layout work, left to XLA).
    C_ps = C_out // 4
    y = conv.reshape(B, H, W, C_ps, 2, 2)            # (b, h, w, c, i, j)
    y = jnp.transpose(y, (0, 3, 1, 4, 2, 5))         # (b, c, h, i, w, j)
    return y.reshape(B, C_ps, 2 * H, 2 * W)


if __name__ == "__main__":
    key = jax.random.PRNGKey(0)
    k_x, k_w = jax.random.split(key)

    # Small shapes consistent with the module: batch=2, n_feat=4, spatial=16.
    B, n_feat, H, W = 2, 4, 16, 16
    C_out = 2 * n_feat

    # Snap values to bf16-representable f32 so MXU rounding modes cannot cause
    # a mismatch against the XLA reference conv.
    x = jax.random.normal(k_x, (B, n_feat, H, W), dtype=jnp.float32)
    x = x.astype(jnp.bfloat16).astype(jnp.float32)
    w = 0.1 * jax.random.normal(k_w, (C_out, n_feat, 3, 3), dtype=jnp.float32)
    w = w.astype(jnp.bfloat16).astype(jnp.float32)

    out = jax.block_until_ready(jax.jit(upsample)(x, w))

    # Reference: XLA conv (NCHW) + PixelShuffle(2).
    conv_ref = jax.lax.conv_general_dilated(
        x, w, window_strides=(1, 1), padding=((1, 1), (1, 1)),
        dimension_numbers=("NCHW", "OIHW", "NCHW"),
        precision=jax.lax.Precision.HIGHEST)
    ref = conv_ref.reshape(B, C_out // 4, 2, 2, H, W)
    ref = jnp.transpose(ref, (0, 1, 4, 2, 5, 3)).reshape(
        B, C_out // 4, 2 * H, 2 * W)

    assert out.shape == ref.shape == (B, n_feat // 2, 2 * H, 2 * W)
    max_err = float(jnp.max(jnp.abs(out - ref)))
    assert max_err < 1e-3, max_err

    print("KERNEL_OK")
</pallas_src>

<mosaic_0001>
module attributes {stable_mosaic.version = 11 : i64} {
  func.func @_conv3x3_band_kernel(%arg0: i32, %arg1: i32, %arg2: memref<1x18x72xf32, #tpu.memory_space<vmem>>, %arg3: memref<3x72x128xf32, #tpu.memory_space<vmem>>, %arg4: memref<1x16x128xf32, #tpu.memory_space<vmem>>) attributes {dimension_semantics = [#tpu.dimension_semantics<parallel>, #tpu.dimension_semantics<arbitrary>], iteration_bounds = array<i64: 2, 1>, scalar_prefetch = 0 : i64, scratch_operands = 0 : i64, tpu.core_type = #tpu.core_type<tc>, window_params = [{transform_indices = @transform_0, window_bounds = array<i64: 1, 18, 72>}, {pipeline_mode = #tpu.pipeline_mode<synchronous>, transform_indices = @transform_1, window_bounds = array<i64: 3, 72, 128>}, {transform_indices = @transform_2, window_bounds = array<i64: 1, 16, 128>}]} {
    %c16_i32 = arith.constant 16 : i32
    %0 = arith.muli %arg1, %c16_i32 : i32
    %1 = tpu.assume_multiple %0, 16 : i32
    %c0 = arith.constant 0 : index
    %2 = arith.index_cast %1 : i32 to index
    %c0_0 = arith.constant 0 : index
    %3 = vector.load %arg2[%c0, %2, %c0_0] : memref<1x18x72xf32, #tpu.memory_space<vmem>>, vector<1x18x72xf32>
    %4 = vector.shape_cast %3 : vector<1x18x72xf32> to vector<18x72xf32>
    %5 = vector.extract_strided_slice %4 {offsets = [0, 0], sizes = [16, 72], strides = [1, 1]} : vector<18x72xf32> to vector<16x72xf32>
    %c0_1 = arith.constant 0 : index
    %c0_2 = arith.constant 0 : index
    %c0_3 = arith.constant 0 : index
    %6 = vector.load %arg3[%c0_1, %c0_2, %c0_3] : memref<3x72x128xf32, #tpu.memory_space<vmem>>, vector<1x72x128xf32>
    %7 = vector.shape_cast %6 : vector<1x72x128xf32> to vector<72x128xf32>
    %cst = arith.constant dense<0.000000e+00> : vector<16x128xf32>
    %8 = tpu.matmul %5, %7, %cst {dimension_numbers = #tpu.dot_dimension_numbers<[1], [0], [0], [1], [0, 0, 1, 1], [], []>} : vector<16x72xf32>, vector<72x128xf32>, vector<16x128xf32> -> vector<16x128xf32>
    %9 = vector.extract_strided_slice %4 {offsets = [1, 0], sizes = [16, 72], strides = [1, 1]} : vector<18x72xf32> to vector<16x72xf32>
    %c1 = arith.constant 1 : index
    %c0_4 = arith.constant 0 : index
    %c0_5 = arith.constant 0 : index
    %10 = vector.load %arg3[%c1, %c0_4, %c0_5] : memref<3x72x128xf32, #tpu.memory_space<vmem>>, vector<1x72x128xf32>
    %11 = vector.shape_cast %10 : vector<1x72x128xf32> to vector<72x128xf32>
    %cst_6 = arith.constant dense<0.000000e+00> : vector<16x128xf32>
    %12 = tpu.matmul %9, %11, %cst_6 {dimension_numbers = #tpu.dot_dimension_numbers<[1], [0], [0], [1], [0, 0, 1, 1], [], []>} : vector<16x72xf32>, vector<72x128xf32>, vector<16x128xf32> -> vector<16x128xf32>
    %13 = arith.addf %8, %12 : vector<16x128xf32>
    %14 = vector.extract_strided_slice %4 {offsets = [2, 0], sizes = [16, 72], strides = [1, 1]} : vector<18x72xf32> to vector<16x72xf32>
    %c2 = arith.constant 2 : index
    %c0_7 = arith.constant 0 : index
    %c0_8 = arith.constant 0 : index
    %15 = vector.load %arg3[%c2, %c0_7, %c0_8] : memref<3x72x128xf32, #tpu.memory_space<vmem>>, vector<1x72x128xf32>
    %16 = vector.shape_cast %15 : vector<1x72x128xf32> to vector<72x128xf32>
    %cst_9 = arith.constant dense<0.000000e+00> : vector<16x128xf32>
    %17 = tpu.matmul %14, %16, %cst_9 {dimension_numbers = #tpu.dot_dimension_numbers<[1], [0], [0], [1], [0, 0, 1, 1], [], []>} : vector<16x72xf32>, vector<72x128xf32>, vector<16x128xf32> -> vector<16x128xf32>
    %18 = arith.addf %13, %17 : vector<16x128xf32>
    %c0_10 = arith.constant 0 : index
    %c0_11 = arith.constant 0 : index
    %c0_12 = arith.constant 0 : index
    %19 = vector.load %arg4[%c0_10, %c0_11, %c0_12] : memref<1x16x128xf32, #tpu.memory_space<vmem>>, vector<1x16x128xf32>
    %20 = vector.shape_cast %19 : vector<1x16x128xf32> to vector<16x128xf32>
    %21 = vector.shape_cast %18 : vector<16x128xf32> to vector<1x16x128xf32>
    tpu.vector_store %arg4[%c0_10, %c0_11, %c0_12], %21 {strides = array<i32>} : memref<1x16x128xf32, #tpu.memory_space<vmem>>, vector<1x16x128xf32>,
    return
  }
  func.func @transform_0(%arg0: i32, %arg1: i32) -> (i32, i32, i32) {
    %c0_i32 = arith.constant 0 : i32
    %c0_i32_0 = arith.constant 0 : i32
    %c0_i32_1 = arith.constant 0 : i32
    return %arg0, %c0_i32, %c0_i32_0 : i32, i32, i32
  }
  func.func @transform_1(%arg0: i32, %arg1: i32) -> (i32, i32, i32) {
    %c0_i32 = arith.constant 0 : i32
    %c0_i32_0 = arith.constant 0 : i32
    %c0_i32_1 = arith.constant 0 : i32
    %c0_i32_2 = arith.constant 0 : i32
    return %c0_i32, %c0_i32_0, %c0_i32_1 : i32, i32, i32
  }
  func.func @transform_2(%arg0: i32, %arg1: i32) -> (i32, i32, i32) {
    %c0_i32 = arith.constant 0 : i32
    %c0_i32_0 = arith.constant 0 : i32
    return %arg0, %arg1, %c0_i32 : i32, i32, i32
  }
}

</mosaic_0001>

<llo_original>
// kernel: upsample.1
$region0: #{upsample.1}
  #allocation0 [shape = 'u32[]', space=smem, size = 0x4, offset = 0x4, fixed_abs, tag = 'smem constant byte address 0x4 - core index']
  #allocation1 [shape = 'u32[72,128]{1,0:T(1,128)}', space=vmem, size = 0x9000, scoped, tag = 'internal scratch']
  %s0 = inlined_call_operand.vmem [shape: f32[2,18,72], index: 0, kind: input, shape index: {}]
  %s1 = inlined_call_operand.vmem [shape: f32[3,72,128], index: 1, kind: input, shape index: {}]
  %s2 = inlined_call_operand.vmem [shape: f32[2,16,128], index: 2, kind: output, shape index: {}]
  %s3 = sld [smem:[#allocation0]]
  $region41: #{upsample.1} parent=0
    _
  %s5 = ssub.s32 1, %s3
  %s6 = scalar_select 0, %s5, %s3
  loop: start=0, step=1, limit=4
  $region2: #{upsample.1} parent=0 // loop_pre_header
    _
  $region3: #{upsample.1} parent=0 // loop_header
    %s8 = sphi 0, %s12
    %p9 = scmp.ge.s32.totalorder %s8, 4
    %s15 = sphi 0, %s27
    %s16 = sphi 0, %s23
    %s17 = sphi 0, %s15
    %s18 = sphi 0, %s16
    %s19 = sphi 0, %s17
    %s20 = sphi 0, %s18
    %s30 = sphi 0, %s32
    %s33 = sphi 0, %s30
    %s34 = sphi 0, %s33
    %s50 = sphi 0, %s34
    %s54 = sphi 0, %s54
    %s56 = sphi 0, %s54
    %s57 = sphi 0, %s56
    %s71 = sphi 0, %s57
    %s79 = sphi 0, %s81
    %s82 = sphi 0, %s79
    %s83 = sphi 0, %s82
    %s99 = sphi 0, %s83
  $region4: #{upsample.1} parent=0 // loop_header_branch
    %11 = sbr.rel (%p9) target = $region8
  $region5: #{upsample.1} parent=0 // loop_body
    %s13 = ssub.s32 %s8, 1
    %s14 = ssub.s32 %s8, 2
    %s21 = sadd.s32 1, %s16
    %p22 = scmp.ge.s32.totalorder %s21, 1
    %s23 = scalar_select %p22, 0, %s21
    %s24 = sadd.s32 1, %s15
    %s25 = scalar_select %p22, %s24, %s15
    %p26 = scmp.ge.s32.totalorder %s25, 2
    %s27 = scalar_select %p26, 0, %s25
    %s28 = ssub.s32 %s15, %s27
    %p29 = scmp.eq.s32.totalorder %s28, 0
    %s31 = sadd.s32 %s30, 1
    %s32 = scalar_select %p29, %s30, %s31
    %p35 = pneg %p29
    %p36 = scmp.eq.s32.totalorder %s8, 1
    %p37 = por %p35, %p36
    %p38 = scmp.ne.s32.totalorder %s30, %s33
    %p39 = scmp.eq.s32.totalorder %s8, 0
    %p40 = por %p38, %p39
    %p41 = scmp.ne.s32.totalorder %s30, %s33
    %p42 = scmp.eq.s32.totalorder %s13, 1
    %p43 = por %p41, %p42
    %p44 = scmp.ne.s32.totalorder %s33, %s34
    %p45 = scmp.eq.s32.totalorder %s13, 0
    %p46 = por %p44, %p45
    %p47 = scmp.ne.s32.totalorder %s33, %s34
    %p48 = scmp.eq.s32.totalorder %s14, 1
    %p49 = por %p47, %p48
    %p51 = scmp.ne.s32.totalorder %s34, %s50
    %p52 = scmp.eq.s32.totalorder %s14, 0
    %p53 = por %p51, %p52
    %s55 = sadd.s32 %s54, 1
    %p58 = scmp.eq.s32.totalorder %s8, 1
    %p59 = scmp.ne.s32.totalorder %s54, %s56
    %p60 = scmp.eq.s32.totalorder %s8, 0
    %p61 = por %p59, %p60
    %p62 = scmp.ne.s32.totalorder %s54, %s56
    %p63 = scmp.eq.s32.totalorder %s13, 1
    %p64 = por %p62, %p63
    %p65 = scmp.ne.s32.totalorder %s56, %s57
    %p66 = scmp.eq.s32.totalorder %s13, 0
    %p67 = por %p65, %p66
    %p68 = scmp.ne.s32.totalorder %s56, %s57
    %p69 = scmp.eq.s32.totalorder %s14, 1
    %p70 = por %p68, %p69
    %p72 = scmp.ne.s32.totalorder %s57, %s71
    %p73 = scmp.eq.s32.totalorder %s14, 0
    %p74 = por %p72, %p73
    %s75 = ssub.s32 %s15, %s27
    %s76 = ssub.s32 %s16, %s23
    %s77 = sor.u32 %s75, %s76
    %p78 = scmp.eq.s32.totalorder %s77, 0
    %s80 = sadd.s32 %s79, 1
    %s81 = scalar_select %p78, %s79, %s80
    %p84 = pneg %p78
    %p85 = scmp.eq.s32.totalorder %s8, 1
    %p86 = por %p84, %p85
    %p87 = scmp.ne.s32.totalorder %s79, %s82
    %p88 = scmp.eq.s32.totalorder %s8, 0
    %p89 = por %p87, %p88
    %p90 = scmp.ne.s32.totalorder %s79, %s82
    %p91 = scmp.eq.s32.totalorder %s13, 1
    %p92 = por %p90, %p91
    %p93 = scmp.ne.s32.totalorder %s82, %s83
    %p94 = scmp.eq.s32.totalorder %s13, 0
    %p95 = por %p93, %p94
    %p96 = scmp.ne.s32.totalorder %s82, %s83
    %p97 = scmp.eq.s32.totalorder %s14, 1
    %p98 = por %p96, %p97
    %p100 = scmp.ne.s32.totalorder %s83, %s99
    %p101 = scmp.eq.s32.totalorder %s14, 0
    %p102 = por %p100, %p101
    %p103 = scmp.le.s32.totalorder 1, %s8
    %p104 = scmp.lt.s32.totalorder %s8, 3
    %p105 = pnand %p103, %p104
    %p106 = pneg %p105
    // Predicated region
    $region9: #{upsample.1} parent=5 // pred_check
      _
    $region10: #{upsample.1} parent=5 // pred_check_branch
      %108 = sbr.rel (%p105) target = $region12
    $region11: #{upsample.1} parent=5 // pred_region
      %s109 = ssub.s32 %s8, 1
      // Predicated region
      $region13: #{upsample.1} parent=11 // pred_check
        %p110 = pneg %p67
      $region14: #{upsample.1} parent=11 // pred_check_branch
        %112 = sbr.rel (%p110) target = $region16
      $region15: #{upsample.1} parent=11 // pred_region
        _
      $region16: #{upsample.1} parent=11 // pred_fallthru
        _
    $region12: #{upsample.1} parent=5 // pred_fallthru
      _
    %p113 = scmp.lt.s32.totalorder %s8, 2
    // Predicated region
    $region17: #{upsample.1} parent=5 // pred_check
      %p114 = pneg %p113
    $region18: #{upsample.1} parent=5 // pred_check_branch
      %116 = sbr.rel (%p114) target = $region20
    $region19: #{upsample.1} parent=5 // pred_region
      // Predicated region
      $region21: #{upsample.1} parent=19 // pred_check
        %p117 = pneg %p40
      $region22: #{upsample.1} parent=19 // pred_check_branch
        %119 = sbr.rel (%p117) target = $region24
      $region23: #{upsample.1} parent=19 // pred_region
        %p120 = scmp.lt.s32.totalorder %s15, 1
        %s121 = scalar_select %p120, %s15, 1
        %s122 = smul.addr %s121, 3
        %s123 = smul.addr %s122, 8
        %s124 = scalar_lea.vmem %s0, %s123
      $region24: #{upsample.1} parent=19 // pred_fallthru
        _
    $region20: #{upsample.1} parent=5 // pred_fallthru
      _
    %p125 = scmp.le.s32.totalorder 1, %s8
    %p126 = scmp.lt.s32.totalorder %s8, 3
    %p127 = pnand %p125, %p126
    %p128 = pneg %p127
    // Predicated region
    $region25: #{upsample.1} parent=5 // pred_check
      _
    $region26: #{upsample.1} parent=5 // pred_check_branch
      %130 = sbr.rel (%p127) target = $region28
    $region27: #{upsample.1} parent=5 // pred_region
      %s131 = ssub.s32 %s8, 1
      %p132 = scmp.lt.s32.totalorder %s17, 1
      %s133 = scalar_select %p132, %s17, 1
      %s134 = smul.addr %s133, 3
      %s135 = smul.addr %s134, 8
      %s136 = scalar_lea.vmem %s0, %s135
      %p137 = pneg %p46
      %p138 = pneg %p43
      %p139 = pneg %p67
      %p140 = pneg %p64
      %p141 = pneg %p95
      %p142 = pneg %p92
      %s143 = smul.u32 2, %s18
      %p144 = scmp.lt.s32.totalorder %s17, 1
      %s145 = scalar_select %p144, %s17, 1
      %p146 = scmp.lt.s32.totalorder %s143, 1
      %s147 = scalar_select %p146, %s143, 1
      %s148 = smul.addr %s145, 2
      %s149 = sadd.s32 %s147, %s148
      %s150 = smul.addr %s149, 8
      %s151 = scalar_lea.vmem %s2, %s150
      %p152 = scmp.lt.s32.totalorder %s17, 1
      %s153 = scalar_select %p152, %s17, 1
      %s154 = smul.addr %s153, 3
      %s155 = smul.addr %s154, 8
      %s156 = scalar_lea.vmem %s0, %s155
      %s157 = smul.u32 2, %s18
      %p158 = scmp.lt.s32.totalorder %s17, 1
      %s159 = scalar_select %p158, %s17, 1
      %p160 = scmp.lt.s32.totalorder %s157, 1
      %s161 = scalar_select %p160, %s157, 1
      %s162 = smul.addr %s159, 2
      %s163 = sadd.s32 %s161, %s162
      %s164 = smul.addr %s163, 8
      %s165 = scalar_lea.vmem %s2, %s164
      %s166 = smul.u32 2, %s18
      %s167 = smul.u32 %s18, 16
      %s168 = scalar_lea.vmem %s156, %s167
      %v169 = vld [vmem:[%s168] sm:$0xff]
      %v170 = vld [vmem:[%s168 + $0x8] sm:$0xff]
      %v171 = vld [vmem:[%s168 + $0x10] sm:$0x3]
      %v172 = vld [vmem:[%s1] sm:$0xff]
      %v173 = vld [vmem:[%s1 + $0x8] sm:$0xff]
      %v174 = vld [vmem:[%s1 + $0x10] sm:$0xff]
      %v175 = vld [vmem:[%s1 + $0x18] sm:$0xff]
      %v176 = vld [vmem:[%s1 + $0x20] sm:$0xff]
      %v177 = vld [vmem:[%s1 + $0x28] sm:$0xff]
      %v178 = vld [vmem:[%s1 + $0x30] sm:$0xff]
      %v179 = vld [vmem:[%s1 + $0x38] sm:$0xff]
      %v180 = vld [vmem:[%s1 + $0x40] sm:$0xff]
      %s181 = scalar_lea.vmem %s1, 72
      %v182 = vld [vmem:[%s181] sm:$0xff]
      %v183 = vld [vmem:[%s181 + $0x8] sm:$0xff]
      %v184 = vld [vmem:[%s181 + $0x10] sm:$0xff]
      %v185 = vld [vmem:[%s181 + $0x18] sm:$0xff]
      %v186 = vld [vmem:[%s181 + $0x20] sm:$0xff]
      %v187 = vld [vmem:[%s181 + $0x28] sm:$0xff]
      %v188 = vld [vmem:[%s181 + $0x30] sm:$0xff]
      %v189 = vld [vmem:[%s181 + $0x38] sm:$0xff]
      %v190 = vld [vmem:[%s181 + $0x40] sm:$0xff]
      %vm194 = vcmask 1046528
      %v195 = vrot.slane %v169, 1
      %v196 = vrot.slane %v170, 1
      %v197 = vsel %vm194, %v195, %v196
      %v198 = vrot.slane %v171, 1
      %v199 = vsel %vm194, %v196, %v198
      %vm200 = vcmask 588800
      %v201 = vsel %vm200, %v197, 0
      %v203 = vsel %vm200, %v199, 0
      %205 = vmatpush.msra.mxu0 0.0
      %206 = vmatpush.msra.mxu0 0.0
      %207 = vmatpush.msra.mxu0 0.0
      %208 = vmatpush.msra.mxu0 0.0
      %209 = vmatpush.msra.mxu0 0.0
      %210 = vmatpush.msra.mxu0 0.0
      %211 = vmatpush.msra.mxu0 0.0
      %212 = vmatpush.msra.mxu0 %v190
      %213 = vmatpush.msra.mxu0 %v189
      %214 = vmatpush.msra.mxu0 %v188
      %215 = vmatpush.msra.mxu0 %v187
      %216 = vmatpush.msra.mxu0 %v186
      %217 = vmatpush.msra.mxu0 %v185
      %218 = vmatpush.msra.mxu0 %v184
      %219 = vmatpush.msra.mxu0 %v183
      %220 = vmatpush.msra.mxu0 %v182
      %221 = vmatmul.f32.gmra.mxu0 %v201
      %v222 = vpop.f32.mrf.mxu0
      %v223 = vadd.f32 0.0, %v222
      %224 = vmatmul.f32.gmra.mxu0 %v203
      %v225 = vpop.f32.mrf.mxu0
      %v226 = vadd.f32 0.0, %v225
      %227 = vdwg.mxu0
      %v228 = vsel %vm200, %v169, 0
      %v230 = vsel %vm200, %v170, 0
      %232 = vmatpush.msra.mxu0 0.0
      %233 = vmatpush.msra.mxu0 0.0
      %234 = vmatpush.msra.mxu0 0.0
      %235 = vmatpush.msra.mxu0 0.0
      %236 = vmatpush.msra.mxu0 0.0
      %237 = vmatpush.msra.mxu0 0.0
      %238 = vmatpush.msra.mxu0 0.0
      %239 = vmatpush.msra.mxu0 %v180
      %240 = vmatpush.msra.mxu0 %v179
      %241 = vmatpush.msra.mxu0 %v178
      %242 = vmatpush.msra.mxu0 %v177
      %243 = vmatpush.msra.mxu0 %v176
      %244 = vmatpush.msra.mxu0 %v175
      %245 = vmatpush.msra.mxu0 %v174
      %246 = vmatpush.msra.mxu0 %v173
      %247 = vmatpush.msra.mxu0 %v172
      %248 = vmatmul.f32.gmra.mxu0 %v228
      %v249 = vpop.f32.mrf.mxu0
      %v250 = vadd.f32 %v223, %v249
      %251 = vmatmul.f32.gmra.mxu0 %v230
      %v252 = vpop.f32.mrf.mxu0
      %v253 = vadd.f32 %v226, %v252
      %254 = vdwg.mxu0
      %s255 = scalar_lea.vmem %s1, 144
      %v256 = vld [vmem:[%s255] sm:$0xff]
      %v257 = vld [vmem:[%s255 + $0x8] sm:$0xff]
      %v258 = vld [vmem:[%s255 + $0x10] sm:$0xff]
      %v259 = vld [vmem:[%s255 + $0x18] sm:$0xff]
      %v260 = vld [vmem:[%s255 + $0x20] sm:$0xff]
      %v261 = vld [vmem:[%s255 + $0x28] sm:$0xff]
      %v262 = vld [vmem:[%s255 + $0x30] sm:$0xff]
      %v263 = vld [vmem:[%s255 + $0x38] sm:$0xff]
      %v264 = vld [vmem:[%s255 + $0x40] sm:$0xff]
      %vm265 = vcmask 1045504
      %v266 = vrot.slane %v169, 2
      %v267 = vrot.slane %v170, 2
      %v268 = vsel %vm265, %v266, %v267
      %v269 = vrot.slane %v171, 2
      %v270 = vsel %vm265, %v267, %v269
      %v271 = vsel %vm200, %v268, 0
      %v273 = vsel %vm200, %v270, 0
      %275 = vmatpush.msra.mxu0 0.0
      %276 = vmatpush.msra.mxu0 0.0
      %277 = vmatpush.msra.mxu0 0.0
      %278 = vmatpush.msra.mxu0 0.0
      %279 = vmatpush.msra.mxu0 0.0
      %280 = vmatpush.msra.mxu0 0.0
      %281 = vmatpush.msra.mxu0 0.0
      %282 = vmatpush.msra.mxu0 %v264
      %283 = vmatpush.msra.mxu0 %v263
      %284 = vmatpush.msra.mxu0 %v262
      %285 = vmatpush.msra.mxu0 %v261
      %286 = vmatpush.msra.mxu0 %v260
      %287 = vmatpush.msra.mxu0 %v259
      %288 = vmatpush.msra.mxu0 %v258
      %289 = vmatpush.msra.mxu0 %v257
      %290 = vmatpush.msra.mxu0 %v256
      %291 = vmatmul.f32.gmra.mxu0 %v271
      %v292 = vpop.f32.mrf.mxu0
      %v293 = vadd.f32 0.0, %v292
      %294 = vmatmul.f32.gmra.mxu0 %v273
      %v295 = vpop.f32.mrf.mxu0
      %v296 = vadd.f32 0.0, %v295
      %297 = vdwg.mxu0
      %v298 = vadd.f32 %v250, %v293
      %v299 = vadd.f32 %v253, %v296
      %300 = vst [vmem:[%s165] sm:$0xff] %v298
      %301 = vst [vmem:[%s165 + $0x8] sm:$0xff] %v299
      %s302 = smul.u32 2, %s18
      %p303 = scmp.lt.s32.totalorder %s17, 1
      %s304 = scalar_select %p303, %s17, 1
      %p305 = scmp.lt.s32.totalorder %s302, 1
      %s306 = scalar_select %p305, %s302, 1
      %s307 = smul.addr %s304, 2
      %s308 = sadd.s32 %s306, %s307
      %s309 = smul.addr %s308, 8
      %s310 = scalar_lea.vmem %s2, %s309
      // Predicated region
      $region29: #{upsample.1} parent=27 // pred_check
        %p311 = pneg %p92
      $region30: #{upsample.1} parent=27 // pred_check_branch
        %313 = sbr.rel (%p311) target = $region32
      $region31: #{upsample.1} parent=27 // pred_region
        %s314 = smul.u32 2, %s18
      $region32: #{upsample.1} parent=27 // pred_fallthru
        _
    $region28: #{upsample.1} parent=5 // pred_fallthru
      _
    %p315 = scmp.le.s32.totalorder 2, %s8
    // Predicated region
    $region33: #{upsample.1} parent=5 // pred_check
      %p316 = pneg %p315
    $region34: #{upsample.1} parent=5 // pred_check_branch
      %318 = sbr.rel (%p316) target = $region36
    $region35: #{upsample.1} parent=5 // pred_region
      %s319 = ssub.s32 %s8, 2
      // Predicated region
      $region37: #{upsample.1} parent=35 // pred_check
        %p320 = pneg %p98
      $region38: #{upsample.1} parent=35 // pred_check_branch
        %322 = sbr.rel (%p320) target = $region40
      $region39: #{upsample.1} parent=35 // pred_region
        %s323 = smul.u32 2, %s20
        %p324 = scmp.lt.s32.totalorder %s19, 1
        %s325 = scalar_select %p324, %s19, 1
        %p326 = scmp.lt.s32.totalorder %s323, 1
        %s327 = scalar_select %p326, %s323, 1
        %s328 = smul.addr %s325, 2
        %s329 = sadd.s32 %s327, %s328
        %s330 = smul.addr %s329, 8
        %s331 = scalar_lea.vmem %s2, %s330
      $region40: #{upsample.1} parent=35 // pred_fallthru
        _
    $region36: #{upsample.1} parent=5 // pred_fallthru
      _
  $region6: #{upsample.1} parent=0 // loop_footer
    %s12 = sadd.s32 1, %s8
  $region7: #{upsample.1} parent=0 // loop_footer_branch
    %7 = sbr.rel target = $region3
  $region8: #{upsample.1} parent=0 // loop_exit
    _

</llo_original>
